<compile_context>
chip_gen: v7x
topology: tpu7x:2x2x1
jax: 0.10.0
libtpu: 0.0.40
codegen_flags: <defaults>
</compile_context>

<pallas_src>
import functools

import jax
import jax.numpy as jnp
from jax import lax
from jax.experimental import pallas as pl
from jax.experimental.pallas import tpu as pltpu


def _cdiv(a, b):
    return -(-a // b)


def _round_up(a, b):
    return _cdiv(a, b) * b


def _complex_kron_kernel(re_ref, ie_ref, rr_ref, ir_ref, out_r_ref, out_i_ref,
                         *, compute_dtype, chunk_rows):
    # re_ref/ie_ref: (ti, NNp)  expanded rows   [ii, j*N+c] = A[i0+ii, j]
    # rr_ref/ir_ref: (tr, NNp)  repeated rows   [rr, j*N+c] = A[r0+rr, c]
    # out_*_ref:     (ti, tr, NNp)              [ii, rr, j*N+c]
    cdt = compute_dtype
    # Hoisted once per grid step and reused by every row chunk.
    r_rep = rr_ref[...].astype(cdt)[None, :, :]     # (1, tr, NNp)
    i_rep = ir_ref[...].astype(cdt)[None, :, :]

    ti = out_r_ref.shape[0]
    g = chunk_rows
    n_full = ti // g
    rem = ti - n_full * g

    def emit(row0, rows):
        # Stream `rows` expanded rows -> one (rows, tr, NNp) output slab.
        r_rows = re_ref[pl.ds(row0, rows), :].astype(cdt)[:, None, :]   # (rows,1,NNp)
        i_rows = ie_ref[pl.ds(row0, rows), :].astype(cdt)[:, None, :]
        out_r_ref[pl.ds(row0, rows), :, :] = (
            r_rows * r_rep - i_rows * i_rep).astype(out_r_ref.dtype)
        out_i_ref[pl.ds(row0, rows), :, :] = (
            r_rows * i_rep + i_rows * r_rep).astype(out_i_ref.dtype)

    if n_full == 1:
        emit(0, g)
    elif n_full > 1:
        def body(cc, carry):
            emit(pl.multiple_of(cc * g, g), g)
            return carry
        lax.fori_loop(0, n_full, body, 0)
    if rem:
        emit(n_full * g, rem)


def _vmem_need(ti, tr, g, nnp, in_bytes, out_bytes, compute_bytes):
    """Per-grid-step VMEM estimate, including compute temporaries."""
    return (4 * ti * nnp * in_bytes            # 2 expanded inputs x 2 pipeline buffers
            + 4 * tr * nnp * in_bytes          # 2 repeated inputs x 2 pipeline buffers
            + 4 * ti * tr * nnp * out_bytes    # 2 outputs x 2 pipeline buffers
            + 2 * tr * nnp * compute_bytes     # hoisted rep casts
            + 6 * g * tr * nnp * compute_bytes)  # per-chunk broadcast/product temps


def _pick_tiles(m, nnp, in_bytes, out_bytes, compute_bytes, budget_bytes, min_steps):
    """Pick (ti, tr): maximize the output block under the VMEM budget.
    min_steps (>=2 steps per TensorCore on dual-core v7x) is a soft preference;
    single-TC chips take the biggest block even if that means one grid step."""
    if m <= 8:
        cands = [m]
    else:
        cands = sorted(set(range(8, m + 1, 8)) | {m}, reverse=True)
    g = min(8, m)
    fitting = [(ti, tr) for tr in cands for ti in cands
               if _vmem_need(ti, tr, g, nnp, in_bytes, out_bytes,
                             compute_bytes) <= budget_bytes]
    if not fitting:
        return cands[-1], cands[-1]            # smallest tiles; limit raised to cover them
    preferred = [c for c in fitting
                 if _cdiv(m, c[0]) * _cdiv(m, c[1]) >= min_steps]
    pool = preferred if preferred else fitting
    # Maximize output block size; on ties prefer larger tr (resident repeated operand).
    return max(pool, key=lambda c: (c[0] * c[1], c[1]))


def _device_info():
    vmem_cap = 128 * 1024 * 1024
    try:
        vmem_cap = int(pltpu.get_tpu_info().vmem_capacity_bytes)
    except Exception:
        pass
    kind = ""
    try:
        kind = jax.devices()[0].device_kind.lower()
    except Exception:
        pass
    dual_core = "v7" in kind                                  # 2 TensorCores / chip
    bf16_valu = not any(t in kind for t in ("v2", "v3", "v4", "v5"))
    return vmem_cap, dual_core, bf16_valu


def complex_tensor_product(inputs, *, out_dtype=None, compute_dtype=None,
                           vmem_budget_bytes=None):
    """[real, imag] of A -> [real, imag] of the complex Kronecker product A (x) A.

    Tip: pass out_dtype=jnp.bfloat16 when downstream tolerates it — the kernel
    is HBM-store bound, so halving output bytes is ~2x end-to-end (biggest win
    on v5e's low HBM bandwidth)."""
    # Reproduce the module's input validation semantics.
    if not isinstance(inputs, list):
        raise ValueError('This layer should be called on a list of 2 inputs.')
    if len(inputs) != 2:
        raise ValueError('This layer should be called on a list of 2 inputs.'
                         'Got ' + str(len(inputs)) + ' inputs.')

    real_in, imag_in = inputs
    m, n = real_in.shape
    nn = n * n
    nnp = _round_up(nn, 128)      # lane-dense stores even for awkward N

    in_dtype = real_in.dtype
    out_dtype = jnp.dtype(in_dtype) if out_dtype is None else jnp.dtype(out_dtype)

    vmem_cap, dual_core, bf16_valu = _device_info()
    if compute_dtype is None:
        use_bf16 = (bf16_valu
                    and out_dtype == jnp.dtype(jnp.bfloat16)
                    and jnp.dtype(in_dtype) == jnp.dtype(jnp.bfloat16))
        compute_dtype = jnp.bfloat16 if use_bf16 else jnp.float32

    in_bytes = jnp.dtype(in_dtype).itemsize
    out_bytes = jnp.dtype(out_dtype).itemsize
    c_bytes = jnp.dtype(compute_dtype).itemsize

    if vmem_budget_bytes is None:
        vmem_budget_bytes = (vmem_cap * 5) // 8     # ~80 MiB v5e/v6e, ~40 MiB v7x
    vmem_budget_bytes = min(int(vmem_budget_bytes), (vmem_cap * 7) // 8)

    min_steps = 4 if dual_core else 1               # >=2 pipelined steps per core on v7x
    ti, tr = _pick_tiles(m, nnp, in_bytes, out_bytes, c_bytes,
                         vmem_budget_bytes, min_steps)
    g = min(8, m)

    need = _vmem_need(ti, tr, g, nnp, in_bytes, out_bytes, c_bytes)
    vmem_limit = int(min((vmem_cap * 9) // 10,
                         max(vmem_budget_bytes, need) + (16 << 20)))

    # Host-side layout prep, O(M*N^2) elements (negligible vs O(M^2*N^2) outputs):
    #   exp[i, j*N + c] = A[i, j]   (each element repeated N times along lanes)
    #   rep[r, j*N + c] = A[r, c]   (the matrix tiled N times along lanes)
    def prep(a):
        e = jnp.repeat(a, n, axis=1)
        r = jnp.tile(a, (1, n))
        if nnp != nn:
            pad = ((0, 0), (0, nnp - nn))
            e = jnp.pad(e, pad)
            r = jnp.pad(r, pad)
        return e, r

    r_exp, r_rep = prep(real_in)
    i_exp, i_rep = prep(imag_in)

    grid = (_cdiv(m, ti), _cdiv(m, tr))
    exp_spec = pl.BlockSpec((ti, nnp), lambda i, r: (i, 0))    # constant along r: no re-DMA
    rep_spec = pl.BlockSpec((tr, nnp), lambda i, r: (r, 0))
    out_spec = pl.BlockSpec((ti, tr, nnp), lambda i, r: (i, r, 0))

    kernel = functools.partial(_complex_kron_kernel,
                               compute_dtype=compute_dtype, chunk_rows=g)

    out_r3, out_i3 = pl.pallas_call(
        kernel,
        out_shape=(jax.ShapeDtypeStruct((m, m, nnp), out_dtype),
                   jax.ShapeDtypeStruct((m, m, nnp), out_dtype)),
        grid_spec=pltpu.PrefetchScalarGridSpec(
            num_scalar_prefetch=0,
            grid=grid,
            in_specs=[exp_spec, exp_spec, rep_spec, rep_spec],
            out_specs=[out_spec, out_spec]),
        compiler_params=pltpu.CompilerParams(
            dimension_semantics=("parallel", "parallel"),
            vmem_limit_bytes=vmem_limit),
    )(r_exp, i_exp, r_rep, i_rep)

    if nnp != nn:
        # TODO(synk): awkward N (N*N % 128 != 0) pays one extra slice pass here;
        # lane-dense in-kernel stores are worth more than this copy.
        out_r3 = out_r3[:, :, :nn]
        out_i3 = out_i3[:, :, :nn]

    # out3[i, r, j*N + c] = A[i, j] * A[r, c]; reshaping to the kron layout
    # (i*M + r, j*N + c) is a free contiguous reshape (no extra HBM pass).
    return [out_r3.reshape(m * m, nn), out_i3.reshape(m * m, nn)]


if __name__ == "__main__":
    key = jax.random.PRNGKey(0)
    k_r, k_i = jax.random.split(key)
    M, N = 8, 16
    real_inputs = jax.random.normal(k_r, (M, N), dtype=jnp.float32)
    imag_inputs = jax.random.normal(k_i, (M, N), dtype=jnp.float32)

    real_part, imag_part = complex_tensor_product([real_inputs, imag_inputs])
    jax.block_until_ready(real_part)
    jax.block_until_ready(imag_part)

    # Pure-JAX reference (torch einsum 'ab,cd->acbd' + view == jnp.kron)
    ref_r = jnp.kron(real_inputs, real_inputs) - jnp.kron(imag_inputs, imag_inputs)
    ref_i = jnp.kron(real_inputs, imag_inputs) + jnp.kron(imag_inputs, real_inputs)

    assert real_part.shape == (M * M, N * N) and imag_part.shape == (M * M, N * N)
    assert jnp.allclose(real_part, ref_r, atol=1e-5, rtol=1e-5)
    assert jnp.allclose(imag_part, ref_i, atol=1e-5, rtol=1e-5)
    print("KERNEL_OK")
</pallas_src>

<mosaic_0001>
module attributes {stable_mosaic.version = 11 : i64} {
  func.func @_complex_kron_kernel(%arg0: i32, %arg1: i32, %arg2: memref<8x256xf32, #tpu.memory_space<vmem>>, %arg3: memref<8x256xf32, #tpu.memory_space<vmem>>, %arg4: memref<8x256xf32, #tpu.memory_space<vmem>>, %arg5: memref<8x256xf32, #tpu.memory_space<vmem>>, %arg6: memref<8x8x256xf32, #tpu.memory_space<vmem>>, %arg7: memref<8x8x256xf32, #tpu.memory_space<vmem>>) attributes {dimension_semantics = [#tpu.dimension_semantics<parallel>, #tpu.dimension_semantics<parallel>], iteration_bounds = array<i64: 1, 1>, scalar_prefetch = 0 : i64, scratch_operands = 0 : i64, tpu.core_type = #tpu.core_type<tc>, window_params = [{transform_indices = @transform_0, window_bounds = array<i64: 8, 256>}, {transform_indices = @transform_1, window_bounds = array<i64: 8, 256>}, {transform_indices = @transform_2, window_bounds = array<i64: 8, 256>}, {transform_indices = @transform_3, window_bounds = array<i64: 8, 256>}, {transform_indices = @transform_4, window_bounds = array<i64: 8, 8, 256>}, {transform_indices = @transform_5, window_bounds = array<i64: 8, 8, 256>}]} {
    %c0 = arith.constant 0 : index
    %c0_0 = arith.constant 0 : index
    %0 = vector.load %arg4[%c0, %c0_0] : memref<8x256xf32, #tpu.memory_space<vmem>>, vector<8x256xf32>
    %1 = vector.shape_cast %0 : vector<8x256xf32> to vector<1x8x256xf32>
    %c0_1 = arith.constant 0 : index
    %c0_2 = arith.constant 0 : index
    %2 = vector.load %arg5[%c0_1, %c0_2] : memref<8x256xf32, #tpu.memory_space<vmem>>, vector<8x256xf32>
    %3 = vector.shape_cast %2 : vector<8x256xf32> to vector<1x8x256xf32>
    %c0_3 = arith.constant 0 : index
    %c0_4 = arith.constant 0 : index
    %4 = vector.load %arg2[%c0_3, %c0_4] : memref<8x256xf32, #tpu.memory_space<vmem>>, vector<8x256xf32>
    %5 = vector.shape_cast %4 : vector<8x256xf32> to vector<8x1x256xf32>
    %c0_5 = arith.constant 0 : index
    %c0_6 = arith.constant 0 : index
    %6 = vector.load %arg3[%c0_5, %c0_6] : memref<8x256xf32, #tpu.memory_space<vmem>>, vector<8x256xf32>
    %7 = vector.shape_cast %6 : vector<8x256xf32> to vector<8x1x256xf32>
    %8 = vector.broadcast %5 : vector<8x1x256xf32> to vector<8x8x256xf32>
    %9 = vector.broadcast %1 : vector<1x8x256xf32> to vector<8x8x256xf32>
    %10 = arith.mulf %8, %9 : vector<8x8x256xf32>
    %11 = vector.broadcast %7 : vector<8x1x256xf32> to vector<8x8x256xf32>
    %12 = vector.broadcast %3 : vector<1x8x256xf32> to vector<8x8x256xf32>
    %13 = arith.mulf %11, %12 : vector<8x8x256xf32>
    %14 = arith.subf %10, %13 : vector<8x8x256xf32>
    %c0_7 = arith.constant 0 : index
    %c0_8 = arith.constant 0 : index
    %c0_9 = arith.constant 0 : index
    %15 = vector.load %arg6[%c0_7, %c0_8, %c0_9] : memref<8x8x256xf32, #tpu.memory_space<vmem>>, vector<8x8x256xf32>
    tpu.vector_store %arg6[%c0_7, %c0_8, %c0_9], %14 {strides = array<i32>} : memref<8x8x256xf32, #tpu.memory_space<vmem>>, vector<8x8x256xf32>,
    %16 = vector.broadcast %5 : vector<8x1x256xf32> to vector<8x8x256xf32>
    %17 = vector.broadcast %3 : vector<1x8x256xf32> to vector<8x8x256xf32>
    %18 = arith.mulf %16, %17 : vector<8x8x256xf32>
    %19 = vector.broadcast %7 : vector<8x1x256xf32> to vector<8x8x256xf32>
    %20 = vector.broadcast %1 : vector<1x8x256xf32> to vector<8x8x256xf32>
    %21 = arith.mulf %19, %20 : vector<8x8x256xf32>
    %22 = arith.addf %18, %21 : vector<8x8x256xf32>
    %c0_10 = arith.constant 0 : index
    %c0_11 = arith.constant 0 : index
    %c0_12 = arith.constant 0 : index
    %23 = vector.load %arg7[%c0_10, %c0_11, %c0_12] : memref<8x8x256xf32, #tpu.memory_space<vmem>>, vector<8x8x256xf32>
    tpu.vector_store %arg7[%c0_10, %c0_11, %c0_12], %22 {strides = array<i32>} : memref<8x8x256xf32, #tpu.memory_space<vmem>>, vector<8x8x256xf32>,
    return
  }
  func.func @transform_0(%arg0: i32, %arg1: i32) -> (i32, i32) {
    %c0_i32 = arith.constant 0 : i32
    %c0_i32_0 = arith.constant 0 : i32
    return %arg0, %c0_i32 : i32, i32
  }
  func.func @transform_1(%arg0: i32, %arg1: i32) -> (i32, i32) {
    %c0_i32 = arith.constant 0 : i32
    %c0_i32_0 = arith.constant 0 : i32
    return %arg0, %c0_i32 : i32, i32
  }
  func.func @transform_2(%arg0: i32, %arg1: i32) -> (i32, i32) {
    %c0_i32 = arith.constant 0 : i32
    %c0_i32_0 = arith.constant 0 : i32
    return %arg1, %c0_i32 : i32, i32
  }
  func.func @transform_3(%arg0: i32, %arg1: i32) -> (i32, i32) {
    %c0_i32 = arith.constant 0 : i32
    %c0_i32_0 = arith.constant 0 : i32
    return %arg1, %c0_i32 : i32, i32
  }
  func.func @transform_4(%arg0: i32, %arg1: i32) -> (i32, i32, i32) {
    %c0_i32 = arith.constant 0 : i32
    %c0_i32_0 = arith.constant 0 : i32
    return %arg0, %arg1, %c0_i32 : i32, i32, i32
  }
  func.func @transform_5(%arg0: i32, %arg1: i32) -> (i32, i32, i32) {
    %c0_i32 = arith.constant 0 : i32
    %c0_i32_0 = arith.constant 0 : i32
    return %arg0, %arg1, %c0_i32 : i32, i32, i32
  }
}

</mosaic_0001>

<llo_original>
// kernel: tpu_custom_call.1
$region0: #{tpu_custom_call.1}
  #allocation0 [shape = 'u32[]', space=smem, size = 0x4, offset = 0x4, fixed_abs, tag = 'smem constant byte address 0x4 - core index']
  #allocation1 [shape = 'u32[144,128]{1,0:T(1,128)}', space=vmem, size = 0x12000, scoped, tag = 'internal scratch']
  %s0 = inlined_call_operand.hbm [shape: f32[8,256], index: 0, kind: input, shape index: {}]
  %s1 = inlined_call_operand.hbm [shape: f32[8,256], index: 1, kind: input, shape index: {}]
  %s2 = inlined_call_operand.hbm [shape: f32[8,256], index: 2, kind: input, shape index: {}]
  %s3 = inlined_call_operand.hbm [shape: f32[8,256], index: 3, kind: input, shape index: {}]
  %s4 = inlined_call_operand.hbm [shape: f32[8,8,256], index: 4, kind: output, shape index: {0}]
  %s5 = inlined_call_operand.hbm [shape: f32[8,8,256], index: 5, kind: output, shape index: {1}]
  %6 = xla_tuple %s4, %s5
  %s7 = sld [smem:[#allocation0]]
  $region50: #{tpu_custom_call.1} parent=0
    _
  %s9 = ssub.s32 1, %s7
  %s10 = scalar_select 0, %s9, %s7
  $region1: #{tpu_custom_call.1} parent=0
    #allocation2 [shape = 'u8[8192]{0}', space=vmem, size = 0x2000, scoped, tag = 'input window, operand 0, single buffered']
    #allocation3 [shape = 's32[1]{0}', space=sflag, size = 0x4, scoped, tag = 'scoped memory for tpu_custom_call.1']
    #allocation4 [shape = 's32[1]{0}', space=sflag, size = 0x4, scoped, tag = 'scoped memory for tpu_custom_call.1']
    #allocation5 [shape = 'u8[8192]{0}', space=vmem, size = 0x2000, scoped, tag = 'input window, operand 1, single buffered']
    #allocation6 [shape = 's32[1]{0}', space=sflag, size = 0x4, scoped, tag = 'scoped memory for tpu_custom_call.1']
    #allocation7 [shape = 'u8[8192]{0}', space=vmem, size = 0x2000, scoped, tag = 'input window, operand 2, single buffered']
    #allocation8 [shape = 'u8[8192]{0}', space=vmem, size = 0x2000, scoped, tag = 'input window, operand 3, single buffered']
    #allocation9 [shape = 's32[1]{0}', space=sflag, size = 0x4, scoped, tag = 'scoped memory for tpu_custom_call.1']
    #allocation10 [shape = 'u8[65536]{0}', space=vmem, size = 0x10000, scoped, tag = 'output window, operand 0, single buffered']
    #allocation11 [shape = 'u8[65536]{0}', space=vmem, size = 0x10000, scoped, tag = 'output window, operand 1, single buffered']
    #allocation12 [shape = 's32[1]{0}', space=sflag, size = 0x4, scoped, tag = 'scoped memory for tpu_custom_call.1']
    %11 = vsyncpa [#allocation3], 0
    %12 = vsyncpa [#allocation6], 0
    %13 = vsyncpa [#allocation9], 0
    %14 = vsyncpa [#allocation4], 0
    %15 = vsyncpa [#allocation12], 0
    // Predicated region
    $region2: #{tpu_custom_call.1} parent=1 // pred_check
      _
    $region3: #{tpu_custom_call.1} parent=1 // pred_check_branch
      %17 = sbr.rel (0) target = $region5
    $region4: #{tpu_custom_call.1} parent=1 // pred_region
      %s19 = ssub.s32 256, 256
      %20 = vsyncadd [#allocation3], %s19
      %s22 = sshll.u32 [#allocation2], 4
      %s23 = int_to_ptr.vmem [resolvable:$true] %s22
      %25 = dma.hbm_to_vmem [thread:$0]  %s0, 256, %s23, [#allocation3]
    $region5: #{tpu_custom_call.1} parent=1 // pred_fallthru
      _
    // Predicated region
    $region6: #{tpu_custom_call.1} parent=1 // pred_check
      _
    $region7: #{tpu_custom_call.1} parent=1 // pred_check_branch
      %27 = sbr.rel (0) target = $region9
    $region8: #{tpu_custom_call.1} parent=1 // pred_region
      %s29 = ssub.s32 256, 256
      %30 = vsyncadd [#allocation6], %s29
      %s32 = sshll.u32 [#allocation5], 4
      %s33 = int_to_ptr.vmem [resolvable:$true] %s32
      %35 = dma.hbm_to_vmem [thread:$0]  %s1, 256, %s33, [#allocation6]
    $region9: #{tpu_custom_call.1} parent=1 // pred_fallthru
      _
    // Predicated region
    $region10: #{tpu_custom_call.1} parent=1 // pred_check
      _
    $region11: #{tpu_custom_call.1} parent=1 // pred_check_branch
      %37 = sbr.rel (0) target = $region13
    $region12: #{tpu_custom_call.1} parent=1 // pred_region
      %s39 = ssub.s32 256, 256
      %40 = vsyncadd [#allocation6], %s39
      %s42 = sshll.u32 [#allocation7], 4
      %s43 = int_to_ptr.vmem [resolvable:$true] %s42
      %45 = dma.hbm_to_vmem [thread:$0]  %s2, 256, %s43, [#allocation6]
    $region13: #{tpu_custom_call.1} parent=1 // pred_fallthru
      _
    // Predicated region
    $region14: #{tpu_custom_call.1} parent=1 // pred_check
      _
    $region15: #{tpu_custom_call.1} parent=1 // pred_check_branch
      %47 = sbr.rel (0) target = $region17
    $region16: #{tpu_custom_call.1} parent=1 // pred_region
      %s49 = ssub.s32 256, 256
      %50 = vsyncadd [#allocation9], %s49
      %s52 = sshll.u32 [#allocation8], 4
      %s53 = int_to_ptr.vmem [resolvable:$true] %s52
      %55 = dma.hbm_to_vmem [thread:$0]  %s3, 256, %s53, [#allocation9]
    $region17: #{tpu_custom_call.1} parent=1 // pred_fallthru
      _
    // Predicated region
    $region18: #{tpu_custom_call.1} parent=1 // pred_check
      _
    $region19: #{tpu_custom_call.1} parent=1 // pred_check_branch
      %57 = sbr.rel (0) target = $region21
    $region20: #{tpu_custom_call.1} parent=1 // pred_region
      %58 = dma.done [#allocation3], 256
    $region21: #{tpu_custom_call.1} parent=1 // pred_fallthru
      _
    // Predicated region
    $region22: #{tpu_custom_call.1} parent=1 // pred_check
      _
    $region23: #{tpu_custom_call.1} parent=1 // pred_check_branch
      %60 = sbr.rel (0) target = $region25
    $region24: #{tpu_custom_call.1} parent=1 // pred_region
      %61 = dma.done [#allocation6], 256
    $region25: #{tpu_custom_call.1} parent=1 // pred_fallthru
      _
    // Predicated region
    $region26: #{tpu_custom_call.1} parent=1 // pred_check
      _
    $region27: #{tpu_custom_call.1} parent=1 // pred_check_branch
      %63 = sbr.rel (0) target = $region29
    $region28: #{tpu_custom_call.1} parent=1 // pred_region
      %64 = dma.done [#allocation6], 256
    $region29: #{tpu_custom_call.1} parent=1 // pred_fallthru
      _
    // Predicated region
    $region30: #{tpu_custom_call.1} parent=1 // pred_check
      _
    $region31: #{tpu_custom_call.1} parent=1 // pred_check_branch
      %66 = sbr.rel (0) target = $region33
    $region32: #{tpu_custom_call.1} parent=1 // pred_region
      %67 = dma.done [#allocation9], 256
    $region33: #{tpu_custom_call.1} parent=1 // pred_fallthru
      _
    %v68 = vld [vmem:[#allocation7] sm:$0xff]
    %v69 = vld [vmem:[#allocation7 + $0x8] sm:$0xff]
    %v70 = vld [vmem:[#allocation8] sm:$0xff]
    %v71 = vld [vmem:[#allocation8 + $0x8] sm:$0xff]
    %v72 = vld [vmem:[#allocation2] sm:$0xff]
    %v73 = vld [vmem:[#allocation2 + $0x8] sm:$0xff]
    %v76 = vcombine.low %v72, %v73
    %v77 = vcombine.high %v72, %v73
    %v79 = vunpack.c.l.s4 1966171168
    %v80 = vunpack.c.0.s8 %v79
    %v81 = vlaneseq
    %v82 = vshrl.u32 %v81, 7
    %v83 = vsub.s32 %v80, %v82
    %v84 = vrot.slane %v76, %v83
    %v86 = vunpack.c.l.s4 1966171168
    %v87 = vunpack.c.0.s8 %v86
    %v88 = vlaneseq
    %v89 = vshrl.u32 %v88, 7
    %v90 = vsub.s32 %v87, %v89
    %v91 = vrot.slane %v77, %v90
    %v92 = vcombine.high %v84, %v84
    %v93 = vcombine.high %v91, %v91
    %v95 = vunpack.c.l.s4 1966171168
    %v96 = vunpack.c.0.s8 %v95
    %v97 = vlaneseq
    %v98 = vshrl.u32 %v97, 7
    %v99 = vsub.s32 %v96, %v98
    %v100 = vrot.slane %v84, %v99
    %v102 = vunpack.c.l.s4 1966171168
    %v103 = vunpack.c.0.s8 %v102
    %v104 = vlaneseq
    %v105 = vshrl.u32 %v104, 7
    %v106 = vsub.s32 %v103, %v105
    %v107 = vrot.slane %v91, %v106
    %v109 = vunpack.c.l.s4 1966171168
    %v110 = vunpack.c.0.s8 %v109
    %v111 = vlaneseq
    %v112 = vshrl.u32 %v111, 7
    %v113 = vsub.s32 %v110, %v112
    %v114 = vrot.slane %v92, %v113
    %v116 = vunpack.c.l.s4 1966171168
    %v117 = vunpack.c.0.s8 %v116
    %v118 = vlaneseq
    %v119 = vshrl.u32 %v118, 7
    %v120 = vsub.s32 %v117, %v119
    %v121 = vrot.slane %v93, %v120
    %v122 = vcombine.high %v100, %v100
    %v123 = vcombine.high %v107, %v107
    %v124 = vcombine.high %v114, %v114
    %v125 = vcombine.high %v121, %v121
    %v126 = vld [vmem:[#allocation5] sm:$0xff]
    %v127 = vld [vmem:[#allocation5 + $0x8] sm:$0xff]
    %v130 = vcombine.low %v126, %v127
    %v131 = vcombine.high %v126, %v127
    %v133 = vunpack.c.l.s4 1966171168
    %v134 = vunpack.c.0.s8 %v133
    %v135 = vlaneseq
    %v136 = vshrl.u32 %v135, 7
    %v137 = vsub.s32 %v134, %v136
    %v138 = vrot.slane %v130, %v137
    %v140 = vunpack.c.l.s4 1966171168
    %v141 = vunpack.c.0.s8 %v140
    %v142 = vlaneseq
    %v143 = vshrl.u32 %v142, 7
    %v144 = vsub.s32 %v141, %v143
    %v145 = vrot.slane %v131, %v144
    %v146 = vcombine.high %v138, %v138
    %v147 = vcombine.high %v145, %v145
    %v149 = vunpack.c.l.s4 1966171168
    %v150 = vunpack.c.0.s8 %v149
    %v151 = vlaneseq
    %v152 = vshrl.u32 %v151, 7
    %v153 = vsub.s32 %v150, %v152
    %v154 = vrot.slane %v138, %v153
    %v156 = vunpack.c.l.s4 1966171168
    %v157 = vunpack.c.0.s8 %v156
    %v158 = vlaneseq
    %v159 = vshrl.u32 %v158, 7
    %v160 = vsub.s32 %v157, %v159
    %v161 = vrot.slane %v145, %v160
    %v163 = vunpack.c.l.s4 1966171168
    %v164 = vunpack.c.0.s8 %v163
    %v165 = vlaneseq
    %v166 = vshrl.u32 %v165, 7
    %v167 = vsub.s32 %v164, %v166
    %v168 = vrot.slane %v146, %v167
    %v170 = vunpack.c.l.s4 1966171168
    %v171 = vunpack.c.0.s8 %v170
    %v172 = vlaneseq
    %v173 = vshrl.u32 %v172, 7
    %v174 = vsub.s32 %v171, %v173
    %v175 = vrot.slane %v147, %v174
    %v176 = vcombine.high %v154, %v154
    %v177 = vcombine.high %v161, %v161
    %v178 = vcombine.high %v168, %v168
    %v179 = vcombine.high %v175, %v175
    %v180 = vlaneseq
    %v181 = vshrl.u32 %v180, 7
    %v182 = vsub.s32 0, %v181
    %v183 = vrot.slane %v100, %v182
    %v184 = vlaneseq
    %v185 = vshrl.u32 %v184, 7
    %v186 = vsub.s32 1, %v185
    %v187 = vrot.slane %v100, %v186
    %v188 = vlaneseq
    %v189 = vshrl.u32 %v188, 7
    %v190 = vsub.s32 0, %v189
    %v191 = vrot.slane %v114, %v190
    %v192 = vlaneseq
    %v193 = vshrl.u32 %v192, 7
    %v194 = vsub.s32 1, %v193
    %v195 = vrot.slane %v114, %v194
    %v196 = vlaneseq
    %v197 = vshrl.u32 %v196, 7
    %v198 = vsub.s32 0, %v197
    %v199 = vrot.slane %v122, %v198
    %v200 = vlaneseq
    %v201 = vshrl.u32 %v200, 7
    %v202 = vsub.s32 1, %v201
    %v203 = vrot.slane %v122, %v202
    %v204 = vlaneseq
    %v205 = vshrl.u32 %v204, 7
    %v206 = vsub.s32 0, %v205
    %v207 = vrot.slane %v124, %v206
    %v208 = vlaneseq
    %v209 = vshrl.u32 %v208, 7
    %v210 = vsub.s32 1, %v209
    %v211 = vrot.slane %v124, %v210
    %v212 = vlaneseq
    %v213 = vshrl.u32 %v212, 7
    %v214 = vsub.s32 0, %v213
    %v215 = vrot.slane %v107, %v214
    %v216 = vlaneseq
    %v217 = vshrl.u32 %v216, 7
    %v218 = vsub.s32 1, %v217
    %v219 = vrot.slane %v107, %v218
    %v220 = vlaneseq
    %v221 = vshrl.u32 %v220, 7
    %v222 = vsub.s32 0, %v221
    %v223 = vrot.slane %v121, %v222
    %v224 = vlaneseq
    %v225 = vshrl.u32 %v224, 7
    %v226 = vsub.s32 1, %v225
    %v227 = vrot.slane %v121, %v226
    %v228 = vlaneseq
    %v229 = vshrl.u32 %v228, 7
    %v230 = vsub.s32 0, %v229
    %v231 = vrot.slane %v123, %v230
    %v232 = vlaneseq
    %v233 = vshrl.u32 %v232, 7
    %v234 = vsub.s32 1, %v233
    %v235 = vrot.slane %v123, %v234
    %v236 = vlaneseq
    %v237 = vshrl.u32 %v236, 7
    %v238 = vsub.s32 0, %v237
    %v239 = vrot.slane %v125, %v238
    %v240 = vlaneseq
    %v241 = vshrl.u32 %v240, 7
    %v242 = vsub.s32 1, %v241
    %v243 = vrot.slane %v125, %v242
    %v260 = vmul.f32 %v183, %v68
    %v261 = vmul.f32 %v187, %v69
    %v262 = vmul.f32 %v191, %v68
    %v263 = vmul.f32 %v195, %v69
    %v264 = vmul.f32 %v199, %v68
    %v265 = vmul.f32 %v203, %v69
    %v266 = vmul.f32 %v207, %v68
    %v267 = vmul.f32 %v211, %v69
    %v268 = vmul.f32 %v215, %v68
    %v269 = vmul.f32 %v219, %v69
    %v270 = vmul.f32 %v223, %v68
    %v271 = vmul.f32 %v227, %v69
    %v272 = vmul.f32 %v231, %v68
    %v273 = vmul.f32 %v235, %v69
    %v274 = vmul.f32 %v239, %v68
    %v275 = vmul.f32 %v243, %v69
    %v276 = vlaneseq
    %v277 = vshrl.u32 %v276, 7
    %v278 = vsub.s32 0, %v277
    %v279 = vrot.slane %v154, %v278
    %v280 = vlaneseq
    %v281 = vshrl.u32 %v280, 7
    %v282 = vsub.s32 1, %v281
    %v283 = vrot.slane %v154, %v282
    %v284 = vlaneseq
    %v285 = vshrl.u32 %v284, 7
    %v286 = vsub.s32 0, %v285
    %v287 = vrot.slane %v168, %v286
    %v288 = vlaneseq
    %v289 = vshrl.u32 %v288, 7
    %v290 = vsub.s32 1, %v289
    %v291 = vrot.slane %v168, %v290
    %v292 = vlaneseq
    %v293 = vshrl.u32 %v292, 7
    %v294 = vsub.s32 0, %v293
    %v295 = vrot.slane %v176, %v294
    %v296 = vlaneseq
    %v297 = vshrl.u32 %v296, 7
    %v298 = vsub.s32 1, %v297
    %v299 = vrot.slane %v176, %v298
    %v300 = vlaneseq
    %v301 = vshrl.u32 %v300, 7
    %v302 = vsub.s32 0, %v301
    %v303 = vrot.slane %v178, %v302
    %v304 = vlaneseq
    %v305 = vshrl.u32 %v304, 7
    %v306 = vsub.s32 1, %v305
    %v307 = vrot.slane %v178, %v306
    %v308 = vlaneseq
    %v309 = vshrl.u32 %v308, 7
    %v310 = vsub.s32 0, %v309
    %v311 = vrot.slane %v161, %v310
    %v312 = vlaneseq
    %v313 = vshrl.u32 %v312, 7
    %v314 = vsub.s32 1, %v313
    %v315 = vrot.slane %v161, %v314
    %v316 = vlaneseq
    %v317 = vshrl.u32 %v316, 7
    %v318 = vsub.s32 0, %v317
    %v319 = vrot.slane %v175, %v318
    %v320 = vlaneseq
    %v321 = vshrl.u32 %v320, 7
    %v322 = vsub.s32 1, %v321
    %v323 = vrot.slane %v175, %v322
    %v324 = vlaneseq
    %v325 = vshrl.u32 %v324, 7
    %v326 = vsub.s32 0, %v325
    %v327 = vrot.slane %v177, %v326
    %v328 = vlaneseq
    %v329 = vshrl.u32 %v328, 7
    %v330 = vsub.s32 1, %v329
    %v331 = vrot.slane %v177, %v330
    %v332 = vlaneseq
    %v333 = vshrl.u32 %v332, 7
    %v334 = vsub.s32 0, %v333
    %v335 = vrot.slane %v179, %v334
    %v336 = vlaneseq
    %v337 = vshrl.u32 %v336, 7
    %v338 = vsub.s32 1, %v337
    %v339 = vrot.slane %v179, %v338
    %v356 = vmul.f32 %v279, %v70
    %v357 = vmul.f32 %v283, %v71
    %v358 = vmul.f32 %v287, %v70
    %v359 = vmul.f32 %v291, %v71
    %v360 = vmul.f32 %v295, %v70
    %v361 = vmul.f32 %v299, %v71
    %v362 = vmul.f32 %v303, %v70
    %v363 = vmul.f32 %v307, %v71
    %v364 = vmul.f32 %v311, %v70
    %v365 = vmul.f32 %v315, %v71
    %v366 = vmul.f32 %v319, %v70
    %v367 = vmul.f32 %v323, %v71
    %v368 = vmul.f32 %v327, %v70
    %v369 = vmul.f32 %v331, %v71
    %v370 = vmul.f32 %v335, %v70
    %v371 = vmul.f32 %v339, %v71
    %v372 = vsub.f32 %v260, %v356
    %v373 = vsub.f32 %v261, %v357
    %v374 = vsub.f32 %v262, %v358
    %v375 = vsub.f32 %v263, %v359
    %v376 = vsub.f32 %v264, %v360
    %v377 = vsub.f32 %v265, %v361
    %v378 = vsub.f32 %v266, %v362
    %v379 = vsub.f32 %v267, %v363
    %v380 = vsub.f32 %v268, %v364
    %v381 = vsub.f32 %v269, %v365
    %v382 = vsub.f32 %v270, %v366
    %v383 = vsub.f32 %v271, %v367
    %v384 = vsub.f32 %v272, %v368
    %v385 = vsub.f32 %v273, %v369
    %v386 = vsub.f32 %v274, %v370
    %v387 = vsub.f32 %v275, %v371
    %388 = vst [vmem:[#allocation10] sm:$0xff] %v372
    %389 = vst [vmem:[#allocation10 + $0x8] sm:$0xff] %v373
    %390 = vst [vmem:[#allocation10 + $0x10] sm:$0xff] %v374
    %391 = vst [vmem:[#allocation10 + $0x18] sm:$0xff] %v375
    %392 = vst [vmem:[#allocation10 + $0x20] sm:$0xff] %v376
    %393 = vst [vmem:[#allocation10 + $0x28] sm:$0xff] %v377
    %394 = vst [vmem:[#allocation10 + $0x30] sm:$0xff] %v378
    %395 = vst [vmem:[#allocation10 + $0x38] sm:$0xff] %v379
    %396 = vst [vmem:[#allocation10 + $0x40] sm:$0xff] %v380
    %397 = vst [vmem:[#allocation10 + $0x48] sm:$0xff] %v381
    %398 = vst [vmem:[#allocation10 + $0x50] sm:$0xff] %v382
    %399 = vst [vmem:[#allocation10 + $0x58] sm:$0xff] %v383
    %400 = vst [vmem:[#allocation10 + $0x60] sm:$0xff] %v384
    %401 = vst [vmem:[#allocation10 + $0x68] sm:$0xff] %v385
    %402 = vst [vmem:[#allocation10 + $0x70] sm:$0xff] %v386
    %403 = vst [vmem:[#allocation10 + $0x78] sm:$0xff] %v387
    %v404 = vmul.f32 %v183, %v70
    %v405 = vmul.f32 %v187, %v71
    %v406 = vmul.f32 %v191, %v70
    %v407 = vmul.f32 %v195, %v71
    %v408 = vmul.f32 %v199, %v70
    %v409 = vmul.f32 %v203, %v71
    %v410 = vmul.f32 %v207, %v70
    %v411 = vmul.f32 %v211, %v71
    %v412 = vmul.f32 %v215, %v70
    %v413 = vmul.f32 %v219, %v71
    %v414 = vmul.f32 %v223, %v70
    %v415 = vmul.f32 %v227, %v71
    %v416 = vmul.f32 %v231, %v70
    %v417 = vmul.f32 %v235, %v71
    %v418 = vmul.f32 %v239, %v70
    %v419 = vmul.f32 %v243, %v71
    %v420 = vmul.f32 %v279, %v68
    %v421 = vmul.f32 %v283, %v69
    %v422 = vmul.f32 %v287, %v68
    %v423 = vmul.f32 %v291, %v69
    %v424 = vmul.f32 %v295, %v68
    %v425 = vmul.f32 %v299, %v69
    %v426 = vmul.f32 %v303, %v68
    %v427 = vmul.f32 %v307, %v69
    %v428 = vmul.f32 %v311, %v68
    %v429 = vmul.f32 %v315, %v69
    %v430 = vmul.f32 %v319, %v68
    %v431 = vmul.f32 %v323, %v69
    %v432 = vmul.f32 %v327, %v68
    %v433 = vmul.f32 %v331, %v69
    %v434 = vmul.f32 %v335, %v68
    %v435 = vmul.f32 %v339, %v69
    %v436 = vadd.f32 %v404, %v420
    %v437 = vadd.f32 %v405, %v421
    %v438 = vadd.f32 %v406, %v422
    %v439 = vadd.f32 %v407, %v423
    %v440 = vadd.f32 %v408, %v424
    %v441 = vadd.f32 %v409, %v425
    %v442 = vadd.f32 %v410, %v426
    %v443 = vadd.f32 %v411, %v427
    %v444 = vadd.f32 %v412, %v428
    %v445 = vadd.f32 %v413, %v429
    %v446 = vadd.f32 %v414, %v430
    %v447 = vadd.f32 %v415, %v431
    %v448 = vadd.f32 %v416, %v432
    %v449 = vadd.f32 %v417, %v433
    %v450 = vadd.f32 %v418, %v434
    %v451 = vadd.f32 %v419, %v435
    %452 = vst [vmem:[#allocation11] sm:$0xff] %v436
    %453 = vst [vmem:[#allocation11 + $0x8] sm:$0xff] %v437
    %454 = vst [vmem:[#allocation11 + $0x10] sm:$0xff] %v438
    %455 = vst [vmem:[#allocation11 + $0x18] sm:$0xff] %v439
    %456 = vst [vmem:[#allocation11 + $0x20] sm:$0xff] %v440
    %457 = vst [vmem:[#allocation11 + $0x28] sm:$0xff] %v441
    %458 = vst [vmem:[#allocation11 + $0x30] sm:$0xff] %v442
    %459 = vst [vmem:[#allocation11 + $0x38] sm:$0xff] %v443
    %460 = vst [vmem:[#allocation11 + $0x40] sm:$0xff] %v444
    %461 = vst [vmem:[#allocation11 + $0x48] sm:$0xff] %v445
    %462 = vst [vmem:[#allocation11 + $0x50] sm:$0xff] %v446
    %463 = vst [vmem:[#allocation11 + $0x58] sm:$0xff] %v447
    %464 = vst [vmem:[#allocation11 + $0x60] sm:$0xff] %v448
    %465 = vst [vmem:[#allocation11 + $0x68] sm:$0xff] %v449
    %466 = vst [vmem:[#allocation11 + $0x70] sm:$0xff] %v450
    %467 = vst [vmem:[#allocation11 + $0x78] sm:$0xff] %v451
    // Predicated region
    $region34: #{tpu_custom_call.1} parent=1 // pred_check
      _
    $region35: #{tpu_custom_call.1} parent=1 // pred_check_branch
      %469 = sbr.rel (0) target = $region37
    $region36: #{tpu_custom_call.1} parent=1 // pred_region
      %s471 = ssub.s32 2048, 2048
      %472 = vsyncadd [#allocation4], %s471
      %s473 = sshll.u32 [#allocation10], 4
      %s474 = int_to_ptr.vmem [resolvable:$true] %s473
      %479 = dma.vmem_to_hbm [thread:$0]  %s474, 2048, %s4, [#allocation4], 256, 256, 16
    $region37: #{tpu_custom_call.1} parent=1 // pred_fallthru
      _
    // Predicated region
    $region38: #{tpu_custom_call.1} parent=1 // pred_check
      _
    $region39: #{tpu_custom_call.1} parent=1 // pred_check_branch
      %481 = sbr.rel (0) target = $region41
    $region40: #{tpu_custom_call.1} parent=1 // pred_region
      %s483 = ssub.s32 2048, 2048
      %484 = vsyncadd [#allocation12], %s483
      %s485 = sshll.u32 [#allocation11], 4
      %s486 = int_to_ptr.vmem [resolvable:$true] %s485
      %491 = dma.vmem_to_hbm [thread:$0]  %s486, 2048, %s5, [#allocation12], 256, 256, 16
    $region41: #{tpu_custom_call.1} parent=1 // pred_fallthru
      _
    // Predicated region
    $region42: #{tpu_custom_call.1} parent=1 // pred_check
      _
    $region43: #{tpu_custom_call.1} parent=1 // pred_check_branch
      %493 = sbr.rel (0) target = $region45
    $region44: #{tpu_custom_call.1} parent=1 // pred_region
      %494 = dma.done [#allocation4], 2048
    $region45: #{tpu_custom_call.1} parent=1 // pred_fallthru
      _
    // Predicated region
    $region46: #{tpu_custom_call.1} parent=1 // pred_check
      _
    $region47: #{tpu_custom_call.1} parent=1 // pred_check_branch
      %496 = sbr.rel (0) target = $region49
    $region48: #{tpu_custom_call.1} parent=1 // pred_region
      %497 = dma.done [#allocation12], 2048
    $region49: #{tpu_custom_call.1} parent=1 // pred_fallthru
      _
    %498 = vsyncpa [#allocation3], 1
    %499 = vsyncpa [#allocation6], 1
    %500 = vsyncpa [#allocation9], 1
    %501 = vsyncpa [#allocation4], 1
    %502 = vsyncpa [#allocation12], 1

</llo_original>
